<compile_context>
chip_gen: v5e
topology: v5e:2x2
jax: 0.10.0
libtpu: 0.0.40
codegen_flags: <defaults>
</compile_context>

<pallas_src>
import jax
import jax.numpy as jnp
from jax.experimental import pallas as pl
from jax.experimental.pallas import tpu as pltpu

IN_DIM, H1, H2, OUT_DIM = 8, 64, 32, 2
MAX_TB = 8192  # batch rows (= lanes in the transposed layout) per grid step


def qnet_kernel(x_ref, w1_ref, b1_ref, w2_ref, b2_ref, w3_ref, b3_ref, o_ref):
    # x_ref: (8, TB) lane-dense batch tile; weights/biases VMEM-resident.
    xt = x_ref[...]                                                        # (8, TB)
    h1 = jnp.dot(w1_ref[...], xt, preferred_element_type=jnp.float32) + b1_ref[...]
    h1 = jnp.maximum(h1, 0.0)                                              # (64, TB)
    h2 = jnp.dot(w2_ref[...], h1, preferred_element_type=jnp.float32) + b2_ref[...]
    h2 = jnp.maximum(h2, 0.0)                                              # (32, TB)
    o = jnp.dot(w3_ref[...], h2, preferred_element_type=jnp.float32) + b3_ref[...]
    o_ref[...] = o.astype(o_ref.dtype)                                     # (2, TB)


def _round_up(n, m):
    return ((n + m - 1) // m) * m


def qnet_forward(x, params, *, tb=MAX_TB):
    """x: (B, 8) f32; params = (w1, b1, w2, b2, w3, b3) in PyTorch layout
    (w_i: (out, in), b_i: (out, 1)). Returns (B, 2) f32."""
    w1, b1, w2, b2, w3, b3 = params
    B = x.shape[0]
    xt = x.T  # (8, B): lane-dense layout for the kernel (cheap relayout in the wrapper)

    if B <= 128:
        tb_eff = B  # single (partial-lane) block, grid=(1,); block dims == full array dims
    else:
        tb_eff = max(128, _round_up(min(tb, MAX_TB), 128))
        # Guarantee >= 2 grid steps so v7x's two TensorCores both get work.
        tb_eff = min(tb_eff, _round_up(pl.cdiv(B, 2), 128))
    grid = (pl.cdiv(B, tb_eff),)

    const = lambda shape: pl.BlockSpec(shape, lambda i: (0, 0))  # VMEM-resident operand

    flops = 2 * B * (IN_DIM * H1 + H1 * H2 + H2 * OUT_DIM)
    bytes_accessed = 4 * (
        B * (IN_DIM + OUT_DIM)
        + IN_DIM * H1 + H1 + H1 * H2 + H2 + H2 * OUT_DIM + OUT_DIM
    )
    cost = pl.CostEstimate(flops=flops, transcendentals=0, bytes_accessed=bytes_accessed)

    out_t = pl.pallas_call(
        qnet_kernel,
        out_shape=jax.ShapeDtypeStruct((OUT_DIM, B), jnp.float32),
        grid=grid,
        in_specs=[
            pl.BlockSpec((IN_DIM, tb_eff), lambda i: (0, i)),  # streamed x^T tile
            const(w1.shape), const(b1.shape),
            const(w2.shape), const(b2.shape),
            const(w3.shape), const(b3.shape),
        ],
        out_specs=pl.BlockSpec((OUT_DIM, tb_eff), lambda i: (0, i)),  # lane-dense out^T
        compiler_params=pltpu.CompilerParams(dimension_semantics=("parallel",)),
        cost_estimate=cost,
    )(xt, w1, b1, w2, b2, w3, b3)

    return out_t.T  # (B, 2)


def init_params(key):
    """PyTorch-default Linear init: uniform(-1/sqrt(fan_in), 1/sqrt(fan_in)).
    Weights stored PyTorch-style (out, in); biases as (out, 1) columns."""
    dims = [(IN_DIM, H1), (H1, H2), (H2, OUT_DIM)]
    params = []
    for fan_in, fan_out in dims:
        key, kw, kb = jax.random.split(key, 3)
        bound = 1.0 / jnp.sqrt(jnp.float32(fan_in))
        w = jax.random.uniform(kw, (fan_out, fan_in), jnp.float32, -bound, bound)
        b = jax.random.uniform(kb, (fan_out, 1), jnp.float32, -bound, bound)
        params.extend([w, b])
    return tuple(params)


def qnet_reference(x, params):
    w1, b1, w2, b2, w3, b3 = params
    h = jnp.maximum(x @ w1.T + b1.T, 0.0)
    h = jnp.maximum(h @ w2.T + b2.T, 0.0)
    return h @ w3.T + b3.T


if __name__ == "__main__":
    key = jax.random.PRNGKey(0)
    key, kx_small, kx_big = jax.random.split(key, 3)
    params = init_params(key)

    # Small case matching the spec (state dim = 8, tiny batch).
    batch = 2
    x_small = jax.random.normal(kx_small, (batch, IN_DIM), jnp.float32)
    out_small = jax.block_until_ready(qnet_forward(x_small, params))
    ref_small = qnet_reference(x_small, params)
    assert out_small.shape == (batch, OUT_DIM), out_small.shape
    assert jnp.allclose(out_small, ref_small, atol=1e-4, rtol=1e-4)

    # Larger ragged batch: exercises the multi-step grid + masked boundary block
    # (2500 is not a multiple of the 128-lane tile) and the >=2-step v7x split.
    big_batch = 2500
    x_big = jax.random.normal(kx_big, (big_batch, IN_DIM), jnp.float32)
    out_big = jax.block_until_ready(qnet_forward(x_big, params))
    ref_big = qnet_reference(x_big, params)
    assert out_big.shape == (big_batch, OUT_DIM), out_big.shape
    assert jnp.allclose(out_big, ref_big, atol=1e-4, rtol=1e-4)

    print("KERNEL_OK")
</pallas_src>

<mosaic_0001>
module attributes {stable_mosaic.version = 11 : i64} {
  func.func @qnet_kernel(%arg0: i32, %arg1: memref<8x2xf32, #tpu.memory_space<vmem>>, %arg2: memref<64x8xf32, #tpu.memory_space<vmem>>, %arg3: memref<64x1xf32, #tpu.memory_space<vmem>>, %arg4: memref<32x64xf32, #tpu.memory_space<vmem>>, %arg5: memref<32x1xf32, #tpu.memory_space<vmem>>, %arg6: memref<2x32xf32, #tpu.memory_space<vmem>>, %arg7: memref<2x1xf32, #tpu.memory_space<vmem>>, %arg8: memref<2x2xf32, #tpu.memory_space<vmem>>) attributes {dimension_semantics = [#tpu.dimension_semantics<parallel>], iteration_bounds = array<i64: 1>, scalar_prefetch = 0 : i64, scratch_operands = 0 : i64, tpu.core_type = #tpu.core_type<tc>, window_params = [{transform_indices = @transform_0, window_bounds = array<i64: 8, 2>}, {pipeline_mode = #tpu.pipeline_mode<synchronous>, transform_indices = @transform_1, window_bounds = array<i64: 64, 8>}, {pipeline_mode = #tpu.pipeline_mode<synchronous>, transform_indices = @transform_2, window_bounds = array<i64: 64, 1>}, {pipeline_mode = #tpu.pipeline_mode<synchronous>, transform_indices = @transform_3, window_bounds = array<i64: 32, 64>}, {pipeline_mode = #tpu.pipeline_mode<synchronous>, transform_indices = @transform_4, window_bounds = array<i64: 32, 1>}, {pipeline_mode = #tpu.pipeline_mode<synchronous>, transform_indices = @transform_5, window_bounds = array<i64: 2, 32>}, {pipeline_mode = #tpu.pipeline_mode<synchronous>, transform_indices = @transform_6, window_bounds = array<i64: 2, 1>}, {transform_indices = @transform_7, window_bounds = array<i64: 2, 2>}]} {
    %c0 = arith.constant 0 : index
    %c0_0 = arith.constant 0 : index
    %0 = vector.load %arg1[%c0, %c0_0] : memref<8x2xf32, #tpu.memory_space<vmem>>, vector<8x2xf32>
    %c0_1 = arith.constant 0 : index
    %c0_2 = arith.constant 0 : index
    %1 = vector.load %arg2[%c0_1, %c0_2] : memref<64x8xf32, #tpu.memory_space<vmem>>, vector<64x8xf32>
    %cst = arith.constant dense<0.000000e+00> : vector<64x2xf32>
    %2 = tpu.matmul %1, %0, %cst {dimension_numbers = #tpu.dot_dimension_numbers<[1], [0], [0], [1], [0, 0, 1, 1], [], []>} : vector<64x8xf32>, vector<8x2xf32>, vector<64x2xf32> -> vector<64x2xf32>
    %c0_3 = arith.constant 0 : index
    %c0_4 = arith.constant 0 : index
    %3 = vector.load %arg3[%c0_3, %c0_4] : memref<64x1xf32, #tpu.memory_space<vmem>>, vector<64x1xf32>
    %4 = vector.broadcast %3 : vector<64x1xf32> to vector<64x2xf32>
    %5 = arith.addf %2, %4 : vector<64x2xf32>
    %cst_5 = arith.constant 0.000000e+00 : f32
    %6 = vector.broadcast %cst_5 : f32 to vector<64x2xf32>
    %7 = arith.maximumf %5, %6 : vector<64x2xf32>
    %c0_6 = arith.constant 0 : index
    %c0_7 = arith.constant 0 : index
    %8 = vector.load %arg4[%c0_6, %c0_7] : memref<32x64xf32, #tpu.memory_space<vmem>>, vector<32x64xf32>
    %cst_8 = arith.constant dense<0.000000e+00> : vector<32x2xf32>
    %9 = tpu.matmul %8, %7, %cst_8 {dimension_numbers = #tpu.dot_dimension_numbers<[1], [0], [0], [1], [0, 0, 1, 1], [], []>} : vector<32x64xf32>, vector<64x2xf32>, vector<32x2xf32> -> vector<32x2xf32>
    %c0_9 = arith.constant 0 : index
    %c0_10 = arith.constant 0 : index
    %10 = vector.load %arg5[%c0_9, %c0_10] : memref<32x1xf32, #tpu.memory_space<vmem>>, vector<32x1xf32>
    %11 = vector.broadcast %10 : vector<32x1xf32> to vector<32x2xf32>
    %12 = arith.addf %9, %11 : vector<32x2xf32>
    %cst_11 = arith.constant 0.000000e+00 : f32
    %13 = vector.broadcast %cst_11 : f32 to vector<32x2xf32>
    %14 = arith.maximumf %12, %13 : vector<32x2xf32>
    %c0_12 = arith.constant 0 : index
    %c0_13 = arith.constant 0 : index
    %15 = vector.load %arg6[%c0_12, %c0_13] : memref<2x32xf32, #tpu.memory_space<vmem>>, vector<2x32xf32>
    %cst_14 = arith.constant dense<0.000000e+00> : vector<2x2xf32>
    %16 = tpu.matmul %15, %14, %cst_14 {dimension_numbers = #tpu.dot_dimension_numbers<[1], [0], [0], [1], [0, 0, 1, 1], [], []>} : vector<2x32xf32>, vector<32x2xf32>, vector<2x2xf32> -> vector<2x2xf32>
    %c0_15 = arith.constant 0 : index
    %c0_16 = arith.constant 0 : index
    %17 = vector.load %arg7[%c0_15, %c0_16] : memref<2x1xf32, #tpu.memory_space<vmem>>, vector<2x1xf32>
    %18 = vector.broadcast %17 : vector<2x1xf32> to vector<2x2xf32>
    %19 = arith.addf %16, %18 : vector<2x2xf32>
    %c0_17 = arith.constant 0 : index
    %c0_18 = arith.constant 0 : index
    %20 = vector.load %arg8[%c0_17, %c0_18] : memref<2x2xf32, #tpu.memory_space<vmem>>, vector<2x2xf32>
    tpu.vector_store %arg8[%c0_17, %c0_18], %19 {strides = array<i32>} : memref<2x2xf32, #tpu.memory_space<vmem>>, vector<2x2xf32>,
    return
  }
  func.func @transform_0(%arg0: i32) -> (i32, i32) {
    %c0_i32 = arith.constant 0 : i32
    %c0_i32_0 = arith.constant 0 : i32
    return %c0_i32, %arg0 : i32, i32
  }
  func.func @transform_1(%arg0: i32) -> (i32, i32) {
    %c0_i32 = arith.constant 0 : i32
    %c0_i32_0 = arith.constant 0 : i32
    %c0_i32_1 = arith.constant 0 : i32
    return %c0_i32, %c0_i32_0 : i32, i32
  }
  func.func @transform_2(%arg0: i32) -> (i32, i32) {
    %c0_i32 = arith.constant 0 : i32
    %c0_i32_0 = arith.constant 0 : i32
    %c0_i32_1 = arith.constant 0 : i32
    return %c0_i32, %c0_i32_0 : i32, i32
  }
  func.func @transform_3(%arg0: i32) -> (i32, i32) {
    %c0_i32 = arith.constant 0 : i32
    %c0_i32_0 = arith.constant 0 : i32
    %c0_i32_1 = arith.constant 0 : i32
    return %c0_i32, %c0_i32_0 : i32, i32
  }
  func.func @transform_4(%arg0: i32) -> (i32, i32) {
    %c0_i32 = arith.constant 0 : i32
    %c0_i32_0 = arith.constant 0 : i32
    %c0_i32_1 = arith.constant 0 : i32
    return %c0_i32, %c0_i32_0 : i32, i32
  }
  func.func @transform_5(%arg0: i32) -> (i32, i32) {
    %c0_i32 = arith.constant 0 : i32
    %c0_i32_0 = arith.constant 0 : i32
    %c0_i32_1 = arith.constant 0 : i32
    return %c0_i32, %c0_i32_0 : i32, i32
  }
  func.func @transform_6(%arg0: i32) -> (i32, i32) {
    %c0_i32 = arith.constant 0 : i32
    %c0_i32_0 = arith.constant 0 : i32
    %c0_i32_1 = arith.constant 0 : i32
    return %c0_i32, %c0_i32_0 : i32, i32
  }
  func.func @transform_7(%arg0: i32) -> (i32, i32) {
    %c0_i32 = arith.constant 0 : i32
    %c0_i32_0 = arith.constant 0 : i32
    return %c0_i32, %arg0 : i32, i32
  }
}

</mosaic_0001>

<llo_original>
// kernel: tpu_custom_call.1
$region0: #{tpu_custom_call.1}
  #allocation0 [shape = 'u32[]', space=smem, size = 0x4, offset = 0x4, fixed_abs, tag = 'smem constant byte address 0x4 - core index']
  #allocation1 [shape = 'u32[72,128]{1,0:T(1,128)}', space=vmem, size = 0x9000, scoped, tag = 'internal scratch']
  %s0 = inlined_call_operand.vmem [shape: f32[8,2], index: 0, kind: input, shape index: {}]
  %s1 = inlined_call_operand.vmem [shape: f32[64,8], index: 1, kind: input, shape index: {}]
  %s2 = inlined_call_operand.vmem [shape: f32[64,1], index: 2, kind: input, shape index: {}]
  %s3 = inlined_call_operand.vmem [shape: f32[32,64], index: 3, kind: input, shape index: {}]
  %s4 = inlined_call_operand.vmem [shape: f32[32,1], index: 4, kind: input, shape index: {}]
  %s5 = inlined_call_operand.vmem [shape: f32[2,32], index: 5, kind: input, shape index: {}]
  %s6 = inlined_call_operand.vmem [shape: f32[2,1], index: 6, kind: input, shape index: {}]
  %s7 = inlined_call_operand.hbm [shape: f32[2,2], index: 7, kind: output, shape index: {}]
  %s8 = sld [smem:[#allocation0]]
  $region38: #{tpu_custom_call.1} parent=0
    _
  %s10 = ssub.s32 1, %s8
  %s11 = scalar_select 0, %s10, %s8
  $region1: #{tpu_custom_call.1} parent=0
    #allocation2 [shape = 'u8[1024]{0}', space=vmem, size = 0x400, scoped, tag = 'output window, operand 0, single buffered']
    #allocation3 [shape = 's32[1]{0}', space=sflag, size = 0x4, scoped, tag = 'scoped memory for tpu_custom_call.1']
    %12 = vsyncpa [#allocation3], 0
    // Predicated region
    $region2: #{tpu_custom_call.1} parent=1 // pred_check
      _
    $region3: #{tpu_custom_call.1} parent=1 // pred_check_branch
      %14 = sbr.rel (0) target = $region5
    $region4: #{tpu_custom_call.1} parent=1 // pred_region
      _
    $region5: #{tpu_custom_call.1} parent=1 // pred_fallthru
      _
    // Predicated region
    $region6: #{tpu_custom_call.1} parent=1 // pred_check
      _
    $region7: #{tpu_custom_call.1} parent=1 // pred_check_branch
      %16 = sbr.rel (0) target = $region9
    $region8: #{tpu_custom_call.1} parent=1 // pred_region
      _
    $region9: #{tpu_custom_call.1} parent=1 // pred_fallthru
      _
    // Predicated region
    $region10: #{tpu_custom_call.1} parent=1 // pred_check
      _
    $region11: #{tpu_custom_call.1} parent=1 // pred_check_branch
      %18 = sbr.rel (0) target = $region13
    $region12: #{tpu_custom_call.1} parent=1 // pred_region
      _
    $region13: #{tpu_custom_call.1} parent=1 // pred_fallthru
      _
    // Predicated region
    $region14: #{tpu_custom_call.1} parent=1 // pred_check
      _
    $region15: #{tpu_custom_call.1} parent=1 // pred_check_branch
      %20 = sbr.rel (0) target = $region17
    $region16: #{tpu_custom_call.1} parent=1 // pred_region
      _
    $region17: #{tpu_custom_call.1} parent=1 // pred_fallthru
      _
    // Predicated region
    $region18: #{tpu_custom_call.1} parent=1 // pred_check
      _
    $region19: #{tpu_custom_call.1} parent=1 // pred_check_branch
      %22 = sbr.rel (0) target = $region21
    $region20: #{tpu_custom_call.1} parent=1 // pred_region
      _
    $region21: #{tpu_custom_call.1} parent=1 // pred_fallthru
      _
    // Predicated region
    $region22: #{tpu_custom_call.1} parent=1 // pred_check
      _
    $region23: #{tpu_custom_call.1} parent=1 // pred_check_branch
      %24 = sbr.rel (0) target = $region25
    $region24: #{tpu_custom_call.1} parent=1 // pred_region
      _
    $region25: #{tpu_custom_call.1} parent=1 // pred_fallthru
      _
    // Predicated region
    $region26: #{tpu_custom_call.1} parent=1 // pred_check
      _
    $region27: #{tpu_custom_call.1} parent=1 // pred_check_branch
      %26 = sbr.rel (0) target = $region29
    $region28: #{tpu_custom_call.1} parent=1 // pred_region
      _
    $region29: #{tpu_custom_call.1} parent=1 // pred_fallthru
      _
    %v27 = vld [vmem:[%s0] sm:$0xff]
    %v28 = vld [vmem:[%s1] sm:$0xff]
    %v29 = vld [vmem:[%s1 + $0x8] sm:$0xff]
    %v30 = vld [vmem:[%s1 + $0x10] sm:$0xff]
    %v31 = vld [vmem:[%s1 + $0x18] sm:$0xff]
    %v32 = vld [vmem:[%s1 + $0x20] sm:$0xff]
    %v33 = vld [vmem:[%s1 + $0x28] sm:$0xff]
    %v34 = vld [vmem:[%s1 + $0x30] sm:$0xff]
    %v35 = vld [vmem:[%s1 + $0x38] sm:$0xff]
    %v36 = vld [vmem:[%s2] sm:$0xff]
    %v37 = vld [vmem:[%s2 + $0x8] sm:$0xff]
    %v38 = vld [vmem:[%s2 + $0x10] sm:$0xff]
    %v39 = vld [vmem:[%s2 + $0x18] sm:$0xff]
    %v40 = vld [vmem:[%s2 + $0x20] sm:$0xff]
    %v41 = vld [vmem:[%s2 + $0x28] sm:$0xff]
    %v42 = vld [vmem:[%s2 + $0x30] sm:$0xff]
    %v43 = vld [vmem:[%s2 + $0x38] sm:$0xff]
    %45 = vset.pattern.permute.xlu0 0
    %46 = vperm.xlu0 %45, %v36
    %v47 = vpop.permute.xlu0 %46
    %50 = vset.pattern.permute.xlu0 0
    %51 = vperm.xlu0 %50, %v37
    %v52 = vpop.permute.xlu0 %51
    %55 = vset.pattern.permute.xlu0 0
    %56 = vperm.xlu0 %55, %v38
    %v57 = vpop.permute.xlu0 %56
    %60 = vset.pattern.permute.xlu0 0
    %61 = vperm.xlu0 %60, %v39
    %v62 = vpop.permute.xlu0 %61
    %65 = vset.pattern.permute.xlu0 0
    %66 = vperm.xlu0 %65, %v40
    %v67 = vpop.permute.xlu0 %66
    %70 = vset.pattern.permute.xlu0 0
    %71 = vperm.xlu0 %70, %v41
    %v72 = vpop.permute.xlu0 %71
    %75 = vset.pattern.permute.xlu0 0
    %76 = vperm.xlu0 %75, %v42
    %v77 = vpop.permute.xlu0 %76
    %80 = vset.pattern.permute.xlu0 0
    %81 = vperm.xlu0 %80, %v43
    %v82 = vpop.permute.xlu0 %81
    %vm84 = vcmask 64512
    %v86 = vsel %vm84, %v28, 0
    %v89 = vsel %vm84, %v29, 0
    %v92 = vsel %vm84, %v30, 0
    %v95 = vsel %vm84, %v31, 0
    %v98 = vsel %vm84, %v32, 0
    %v101 = vsel %vm84, %v33, 0
    %v104 = vsel %vm84, %v34, 0
    %v107 = vsel %vm84, %v35, 0
    %109 = vmatpush.msra.mxu0 0.0
    %110 = vmatpush.msra.mxu0 0.0
    %111 = vmatpush.msra.mxu0 0.0
    %112 = vmatpush.msra.mxu0 0.0
    %113 = vmatpush.msra.mxu0 0.0
    %114 = vmatpush.msra.mxu0 0.0
    %115 = vmatpush.msra.mxu0 0.0
    %116 = vmatpush.msra.mxu0 0.0
    %117 = vmatpush.msra.mxu0 0.0
    %118 = vmatpush.msra.mxu0 0.0
    %119 = vmatpush.msra.mxu0 0.0
    %120 = vmatpush.msra.mxu0 0.0
    %121 = vmatpush.msra.mxu0 0.0
    %122 = vmatpush.msra.mxu0 0.0
    %123 = vmatpush.msra.mxu0 0.0
    %124 = vmatpush.msra.mxu0 %v27
    %125 = vmatmul.f32.gmra.mxu0 %v86
    %v126 = vpop.f32.mrf.mxu0
    %v127 = vadd.f32 %v47, %v126
    %128 = vmatmul.f32.gmra.mxu0 %v89
    %v129 = vpop.f32.mrf.mxu0
    %v130 = vadd.f32 %v52, %v129
    %131 = vmatmul.f32.gmra.mxu0 %v92
    %v132 = vpop.f32.mrf.mxu0
    %v133 = vadd.f32 %v57, %v132
    %134 = vmatmul.f32.gmra.mxu0 %v95
    %v135 = vpop.f32.mrf.mxu0
    %v136 = vadd.f32 %v62, %v135
    %137 = vmatmul.f32.gmra.mxu0 %v98
    %v138 = vpop.f32.mrf.mxu0
    %v139 = vadd.f32 %v67, %v138
    %140 = vmatmul.f32.gmra.mxu0 %v101
    %v141 = vpop.f32.mrf.mxu0
    %v142 = vadd.f32 %v72, %v141
    %143 = vmatmul.f32.gmra.mxu0 %v104
    %v144 = vpop.f32.mrf.mxu0
    %v145 = vadd.f32 %v77, %v144
    %146 = vmatmul.f32.gmra.mxu0 %v107
    %v147 = vpop.f32.mrf.mxu0
    %v148 = vadd.f32 %v82, %v147
    %149 = vdwg.mxu0
    %v150 = vmax.f32 %v127, 0.0
    %v151 = vmax.f32 %v130, 0.0
    %v152 = vmax.f32 %v133, 0.0
    %v153 = vmax.f32 %v136, 0.0
    %v154 = vmax.f32 %v139, 0.0
    %v155 = vmax.f32 %v142, 0.0
    %v156 = vmax.f32 %v145, 0.0
    %v157 = vmax.f32 %v148, 0.0
    %v158 = vld [vmem:[%s3] sm:$0xff]
    %v159 = vld [vmem:[%s3 + $0x8] sm:$0xff]
    %v160 = vld [vmem:[%s3 + $0x10] sm:$0xff]
    %v161 = vld [vmem:[%s3 + $0x18] sm:$0xff]
    %v162 = vld [vmem:[%s4] sm:$0xff]
    %v163 = vld [vmem:[%s4 + $0x8] sm:$0xff]
    %v164 = vld [vmem:[%s4 + $0x10] sm:$0xff]
    %v165 = vld [vmem:[%s4 + $0x18] sm:$0xff]
    %167 = vset.pattern.permute.xlu0 0
    %168 = vperm.xlu0 %167, %v162
    %v169 = vpop.permute.xlu0 %168
    %172 = vset.pattern.permute.xlu0 0
    %173 = vperm.xlu0 %172, %v163
    %v174 = vpop.permute.xlu0 %173
    %177 = vset.pattern.permute.xlu0 0
    %178 = vperm.xlu0 %177, %v164
    %v179 = vpop.permute.xlu0 %178
    %182 = vset.pattern.permute.xlu0 0
    %183 = vperm.xlu0 %182, %v165
    %v184 = vpop.permute.xlu0 %183
    %vm186 = vcmask 523264
    %v188 = vsel %vm186, %v158, 0
    %v191 = vsel %vm186, %v159, 0
    %v194 = vsel %vm186, %v160, 0
    %v197 = vsel %vm186, %v161, 0
    %199 = vmatpush.msra.mxu0 0.0
    %200 = vmatpush.msra.mxu0 0.0
    %201 = vmatpush.msra.mxu0 0.0
    %202 = vmatpush.msra.mxu0 0.0
    %203 = vmatpush.msra.mxu0 0.0
    %204 = vmatpush.msra.mxu0 0.0
    %205 = vmatpush.msra.mxu0 0.0
    %206 = vmatpush.msra.mxu0 0.0
    %207 = vmatpush.msra.mxu0 %v157
    %208 = vmatpush.msra.mxu0 %v156
    %209 = vmatpush.msra.mxu0 %v155
    %210 = vmatpush.msra.mxu0 %v154
    %211 = vmatpush.msra.mxu0 %v153
    %212 = vmatpush.msra.mxu0 %v152
    %213 = vmatpush.msra.mxu0 %v151
    %214 = vmatpush.msra.mxu0 %v150
    %215 = vmatmul.f32.gmra.mxu0 %v188
    %v216 = vpop.f32.mrf.mxu0
    %v217 = vadd.f32 %v169, %v216
    %218 = vmatmul.f32.gmra.mxu0 %v191
    %v219 = vpop.f32.mrf.mxu0
    %v220 = vadd.f32 %v174, %v219
    %221 = vmatmul.f32.gmra.mxu0 %v194
    %v222 = vpop.f32.mrf.mxu0
    %v223 = vadd.f32 %v179, %v222
    %224 = vmatmul.f32.gmra.mxu0 %v197
    %v225 = vpop.f32.mrf.mxu0
    %v226 = vadd.f32 %v184, %v225
    %227 = vdwg.mxu0
    %v228 = vmax.f32 %v217, 0.0
    %v229 = vmax.f32 %v220, 0.0
    %v230 = vmax.f32 %v223, 0.0
    %v231 = vmax.f32 %v226, 0.0
    %v232 = vld [vmem:[%s5] sm:$0x3]
    %v233 = vld [vmem:[%s6] sm:$0x3]
    %235 = vset.pattern.permute.xlu0 0
    %236 = vperm.xlu0 %235, %v233
    %v237 = vpop.permute.xlu0 %236
    %vm239 = vcmask 261120
    %v241 = vsel %vm239, %v232, 0
    %243 = vmatpush.msra.mxu0 0.0
    %244 = vmatpush.msra.mxu0 0.0
    %245 = vmatpush.msra.mxu0 0.0
    %246 = vmatpush.msra.mxu0 0.0
    %247 = vmatpush.msra.mxu0 0.0
    %248 = vmatpush.msra.mxu0 0.0
    %249 = vmatpush.msra.mxu0 0.0
    %250 = vmatpush.msra.mxu0 0.0
    %251 = vmatpush.msra.mxu0 0.0
    %252 = vmatpush.msra.mxu0 0.0
    %253 = vmatpush.msra.mxu0 0.0
    %254 = vmatpush.msra.mxu0 0.0
    %255 = vmatpush.msra.mxu0 %v231
    %256 = vmatpush.msra.mxu0 %v230
    %257 = vmatpush.msra.mxu0 %v229
    %258 = vmatpush.msra.mxu0 %v228
    %259 = vmatmul.f32.gmra.mxu0 %v241
    %v260 = vpop.f32.mrf.mxu0
    %v261 = vadd.f32 %v237, %v260
    %262 = vdwg.mxu0
    %vm263 = vcmask 9216
    %264 = vst.msk [vmem:[#allocation2] sm:$0x3] %vm263, %v261
    // Predicated region
    $region30: #{tpu_custom_call.1} parent=1 // pred_check
      _
    $region31: #{tpu_custom_call.1} parent=1 // pred_check_branch
      %266 = sbr.rel (0) target = $region33
    $region32: #{tpu_custom_call.1} parent=1 // pred_region
      %268 = vsyncadd [#allocation3], 0
      %s270 = sshll.u32 [#allocation2], 4
      %s271 = int_to_ptr.vmem [resolvable:$true] %s270
      %s272 = sshll.u32 %s7, 4
      %s273 = int_to_ptr.hbm [resolvable:$true] %s272
      %275 = dma.vmem_to_hbm [thread:$0]  %s271, 32, %s273, [#allocation3]
    $region33: #{tpu_custom_call.1} parent=1 // pred_fallthru
      _
    // Predicated region
    $region34: #{tpu_custom_call.1} parent=1 // pred_check
      _
    $region35: #{tpu_custom_call.1} parent=1 // pred_check_branch
      %277 = sbr.rel (0) target = $region37
    $region36: #{tpu_custom_call.1} parent=1 // pred_region
      %279 = dma.done [#allocation3], 32
    $region37: #{tpu_custom_call.1} parent=1 // pred_fallthru
      _
    %280 = vsyncpa [#allocation3], 1

</llo_original>
